<compile_context>
chip_gen: v5e
topology: v5e:2x2
jax: 0.10.0
libtpu: 0.0.40
codegen_flags: <defaults>
</compile_context>

<pallas_src>
import functools
import math

import jax
import jax.numpy as jnp
from jax import lax
from jax.experimental import pallas as pl
from jax.experimental.pallas import tpu as pltpu


def _round_up(x, m):
    return ((x + m - 1) // m) * m


def _pick_tile(dim, candidates):
    """Largest candidate tile dividing `dim`; else the full dim (a full-extent
    block is always a legal BlockSpec dim)."""
    if dim <= candidates[0]:
        return dim
    for c in candidates:
        if dim % c == 0:
            return c
    return dim


# ----------------------------------------------------------------------------
# Pallas kernel: tiled (patches @ weights) matmul, bf16 operands, f32 VMEM
# accumulator, fused LeakyReLU(0.2) epilogue on the last K step.
# ----------------------------------------------------------------------------
def _matmul_act_kernel(a_ref, w_ref, o_ref, acc_ref, *, negative_slope, apply_act):
    @pl.when(pl.program_id(2) == 0)
    def _init():
        acc_ref[...] = jnp.zeros_like(acc_ref)

    acc_ref[...] += jnp.dot(a_ref[...], w_ref[...],
                            preferred_element_type=jnp.float32)

    @pl.when(pl.program_id(2) == pl.num_programs(2) - 1)
    def _finalize():
        acc = acc_ref[...]
        if apply_act:
            acc = jnp.where(acc >= 0, acc, negative_slope * acc)
        o_ref[...] = acc.astype(o_ref.dtype)


def matmul_act_pallas(a, w, *, negative_slope=0.2, apply_act=True,
                      out_dtype=jnp.bfloat16):
    """out = act(a @ w); a:(M,K), w:(K,N). bf16 operands, f32 accumulation."""
    m, k = a.shape
    k2, n = w.shape
    assert k == k2, (a.shape, w.shape)

    a = a.astype(jnp.bfloat16)
    w = w.astype(jnp.bfloat16)

    # Tile selection under an explicit VMEM budget: keep the A tile <= ~4 MiB in
    # bf16 so the double-buffered working set (A, W, out, acc) stays ~<= 12 MiB.
    tk = _pick_tile(k, (2048, 1024, 512, 256, 128))
    tn = _pick_tile(n, (256, 128))          # 256-wide feeds v6e/v7x 2x256 MXUs
    m_cap = max(256, (4 * 1024 * 1024) // (2 * tk))
    tm = min(2048, m_cap, _round_up(m, 8))
    tm = max(8, (tm // 8) * 8)
    mp = _round_up(m, tm)
    if mp != m:                              # ragged last M tile: plain jnp.pad,
        a = jnp.pad(a, ((0, mp - m), (0, 0)))  # no zeros().at[].set() scatter copy

    grid = (mp // tm, n // tn, k // tk)

    kernel = functools.partial(_matmul_act_kernel,
                               negative_slope=negative_slope,
                               apply_act=apply_act)

    out_itemsize = jnp.dtype(out_dtype).itemsize
    cost = pl.CostEstimate(
        flops=2 * mp * k * n,
        transcendentals=0,
        bytes_accessed=mp * k * 2 + k * n * 2 + mp * n * out_itemsize)

    out = pl.pallas_call(
        kernel,
        out_shape=jax.ShapeDtypeStruct((mp, n), out_dtype),
        grid_spec=pltpu.PrefetchScalarGridSpec(
            num_scalar_prefetch=0,
            grid=grid,
            in_specs=[pl.BlockSpec((tm, tk), lambda i, j, kk: (i, kk)),
                      pl.BlockSpec((tk, tn), lambda i, j, kk: (kk, j))],
            out_specs=pl.BlockSpec((tm, tn), lambda i, j, kk: (i, j)),
            scratch_shapes=[pltpu.VMEM((tm, tn), jnp.float32)]),
        compiler_params=pltpu.CompilerParams(
            # M / N axes "parallel" -> sharded across TensorCores (v7x megacore);
            # K is the in-place reduction axis ("arbitrary").
            dimension_semantics=("parallel", "parallel", "arbitrary"),
            vmem_limit_bytes=32 * 1024 * 1024),
        cost_estimate=cost,
    )(a, w)

    if mp != m:
        out = out[:m]
    return out


# ----------------------------------------------------------------------------
# Conv layer = im2col (XLA glue, pure data rearrangement) + fused Pallas matmul.
# ----------------------------------------------------------------------------
# TODO(synk): replace the HBM-materialized im2col with in-kernel KHxKW tap
# accumulation reading the NHWC activation directly; the stride-2 taps need
# overlapping (halo) row windows that block-index BlockSpecs cannot express, so
# it requires manual DMA (memory_space=pl.ANY + pltpu.make_async_copy).
def _im2col(x_nhwc, ksize, stride, padding):
    n, h, w, c = x_nhwc.shape
    h_o = (h + 2 * padding - ksize) // stride + 1
    w_o = (w + 2 * padding - ksize) // stride + 1
    x_pad = jnp.pad(x_nhwc,
                    ((0, 0), (padding, padding), (padding, padding), (0, 0)))
    cols = []
    for kh in range(ksize):
        for kw in range(ksize):
            cols.append(x_pad[:, kh:kh + stride * h_o:stride,
                              kw:kw + stride * w_o:stride, :])
    patches = jnp.concatenate(cols, axis=-1)       # (n, h_o, w_o, ksize*ksize*c)
    return patches.reshape(n * h_o * w_o, ksize * ksize * c), h_o, w_o


def conv2d_lrelu_pallas(x_nhwc, w_mat, c_out, *, stride, padding,
                        apply_act=True, out_dtype=jnp.bfloat16):
    """Conv2d(4x4, bias=False) + optional LeakyReLU(0.2); NHWC in/out."""
    n = x_nhwc.shape[0]
    a, h_o, w_o = _im2col(x_nhwc, 4, stride, padding)
    out = matmul_act_pallas(a, w_mat, apply_act=apply_act, out_dtype=out_dtype)
    return out.reshape(n, h_o, w_o, c_out)


# ----------------------------------------------------------------------------
# DCDiscriminator (deterministic synthetic weights, all convs bias-free)
# ----------------------------------------------------------------------------
class DCDiscriminatorPallas:
    def __init__(self, in_dim=3, n_feat=512, img_size=256, *, key):
        self.in_dim = in_dim
        n_layers = int(math.log2(img_size) - 2)
        chans = [in_dim] + [n_feat // (2 ** (n_layers - 1 - i))
                            for i in range(n_layers)]        # chans[-1] == n_feat
        self.chans = chans

        keys = jax.random.split(key, n_layers + 1)
        # Weight matrices are reshaped to (16*C_in, C_out) and cast to bf16 ONCE
        # here (perf review: no per-forward weight padding / reshaping).
        self.block_w_f32 = []   # bf16-rounded HWIO weights kept in f32 (reference)
        self.block_wmats = []   # (16*C_in, C_out) bf16 matrices for the kernel
        for j in range(n_layers):
            c_in, c_out = chans[j], chans[j + 1]
            w = jax.random.normal(keys[j], (4, 4, c_in, c_out), jnp.float32)
            w = (w / jnp.sqrt(c_in * 16)).astype(jnp.bfloat16)
            self.block_w_f32.append(w.astype(jnp.float32))
            self.block_wmats.append(w.reshape(16 * c_in, c_out))

        w = jax.random.normal(keys[-1], (4, 4, n_feat, 1), jnp.float32)
        w = (w / jnp.sqrt(n_feat * 16)).astype(jnp.bfloat16)
        self.w_out_f32 = w.astype(jnp.float32)
        self.w_out_mat = w.reshape(16 * n_feat, 1)

    def __call__(self, x_nchw):
        batch = x_nchw.shape[0]
        x = x_nchw
        if x.shape[1] != self.in_dim:
            x = x[:, :self.in_dim]
        # NCHW -> NHWC, bf16 activations throughout (MXU-native, 2x less HBM).
        x = jnp.transpose(x, (0, 2, 3, 1)).astype(jnp.bfloat16)
        for j, w_mat in enumerate(self.block_wmats):
            x = conv2d_lrelu_pallas(x, w_mat, self.chans[j + 1],
                                    stride=2, padding=1, apply_act=True,
                                    out_dtype=jnp.bfloat16)
        # Final 4x4 valid conv over the 4x4 map == a single dot over the
        # flattened map: im2col is an identity reshape here, feed it directly.
        a = x.reshape(batch, -1)                          # (batch, 16*n_feat)
        out = matmul_act_pallas(a, self.w_out_mat, apply_act=False,
                                out_dtype=jnp.float32)
        return out.reshape(batch, 1)


# ----------------------------------------------------------------------------
# Pure-JAX reference (lax.conv) for correctness check.  It uses the same
# bf16-rounded weights and bf16-quantized input as the Pallas path; only the
# intermediate-activation precision differs (f32 here vs bf16 in the kernel).
# ----------------------------------------------------------------------------
def _reference_forward(x_nchw, model):
    x = x_nchw
    if x.shape[1] != model.in_dim:
        x = x[:, :model.in_dim]
    x = x.astype(jnp.bfloat16).astype(jnp.float32)
    for w in model.block_w_f32:
        w_oihw = jnp.transpose(w, (3, 2, 0, 1))
        x = lax.conv_general_dilated(x, w_oihw, (2, 2), [(1, 1), (1, 1)],
                                     dimension_numbers=('NCHW', 'OIHW', 'NCHW'))
        x = jnp.where(x >= 0, x, 0.2 * x)
    w_oihw = jnp.transpose(model.w_out_f32, (3, 2, 0, 1))
    x = lax.conv_general_dilated(x, w_oihw, (1, 1), [(0, 0), (0, 0)],
                                 dimension_numbers=('NCHW', 'OIHW', 'NCHW'))
    return x.reshape(x.shape[0], 1)


if __name__ == "__main__":
    key = jax.random.PRNGKey(0)
    k_x, k_w = jax.random.split(key)

    # Small config consistent with the module: img_size=16 -> n_layers=2,
    # n_feat=32.  Input has 4 channels so the x[:, :in_dim] slice is exercised.
    x = jax.random.normal(k_x, (2, 4, 16, 16), jnp.float32)   # NCHW

    model = DCDiscriminatorPallas(in_dim=3, n_feat=32, img_size=16, key=k_w)

    fwd = jax.jit(lambda inp: model(inp))
    out = jax.block_until_ready(fwd(x))
    assert out.shape == (2, 1), out.shape

    ref = jax.block_until_ready(_reference_forward(x, model))
    assert jnp.allclose(out, ref, atol=5e-2, rtol=5e-2), (out, ref)

    print("KERNEL_OK")
</pallas_src>

<mosaic_0001>
module attributes {stable_mosaic.version = 11 : i64} {
  func.func @_matmul_act_kernel(%arg0: i32, %arg1: i32, %arg2: i32, %arg3: memref<128x48xbf16, #tpu.memory_space<vmem>>, %arg4: memref<48x16xbf16, #tpu.memory_space<vmem>>, %arg5: memref<128x16xbf16, #tpu.memory_space<vmem>>, %arg6: memref<128x16xf32, #tpu.memory_space<vmem>>) attributes {dimension_semantics = [#tpu.dimension_semantics<parallel>, #tpu.dimension_semantics<parallel>, #tpu.dimension_semantics<arbitrary>], iteration_bounds = array<i64: 1, 1, 1>, scalar_prefetch = 0 : i64, scratch_operands = 1 : i64, tpu.core_type = #tpu.core_type<tc>, window_params = [{transform_indices = @transform_0, window_bounds = array<i64: 128, 48>}, {transform_indices = @transform_1, window_bounds = array<i64: 48, 16>}, {transform_indices = @transform_2, window_bounds = array<i64: 128, 16>}]} {
    %c0_i32 = arith.constant 0 : i32
    %0 = arith.cmpi eq, %arg2, %c0_i32 : i32
    %1 = arith.extui %0 : i1 to i32
    %c0_i32_0 = arith.constant 0 : i32
    %2 = arith.cmpi ne, %1, %c0_i32_0 : i32
    scf.if %2 {
      %cst_10 = arith.constant 0.000000e+00 : f32
      %12 = vector.broadcast %cst_10 : f32 to vector<128x16xf32>
      %c0_11 = arith.constant 0 : index
      %c0_12 = arith.constant 0 : index
      %13 = vector.load %arg6[%c0_11, %c0_12] : memref<128x16xf32, #tpu.memory_space<vmem>>, vector<128x16xf32>
      tpu.vector_store %arg6[%c0_11, %c0_12], %12 {strides = array<i32>} : memref<128x16xf32, #tpu.memory_space<vmem>>, vector<128x16xf32>,
    } else {
    }
    %c0 = arith.constant 0 : index
    %c0_1 = arith.constant 0 : index
    %3 = vector.load %arg6[%c0, %c0_1] : memref<128x16xf32, #tpu.memory_space<vmem>>, vector<128x16xf32>
    %c0_2 = arith.constant 0 : index
    %c0_3 = arith.constant 0 : index
    %4 = vector.load %arg3[%c0_2, %c0_3] : memref<128x48xbf16, #tpu.memory_space<vmem>>, vector<128x48xbf16>
    %c0_4 = arith.constant 0 : index
    %c0_5 = arith.constant 0 : index
    %5 = vector.load %arg4[%c0_4, %c0_5] : memref<48x16xbf16, #tpu.memory_space<vmem>>, vector<48x16xbf16>
    %cst = arith.constant dense<0.000000e+00> : vector<128x16xf32>
    %6 = tpu.matmul %4, %5, %cst {dimension_numbers = #tpu.dot_dimension_numbers<[1], [0], [0], [1], [0, 0, 1, 1], [], []>} : vector<128x48xbf16>, vector<48x16xbf16>, vector<128x16xf32> -> vector<128x16xf32>
    %7 = arith.addf %3, %6 : vector<128x16xf32>
    %c0_6 = arith.constant 0 : index
    %c0_7 = arith.constant 0 : index
    %8 = vector.load %arg6[%c0_6, %c0_7] : memref<128x16xf32, #tpu.memory_space<vmem>>, vector<128x16xf32>
    tpu.vector_store %arg6[%c0_6, %c0_7], %7 {strides = array<i32>} : memref<128x16xf32, #tpu.memory_space<vmem>>, vector<128x16xf32>,
    %c0_i32_8 = arith.constant 0 : i32
    %9 = arith.cmpi eq, %arg2, %c0_i32_8 : i32
    %10 = arith.extui %9 : i1 to i32
    %c0_i32_9 = arith.constant 0 : i32
    %11 = arith.cmpi ne, %10, %c0_i32_9 : i32
    scf.if %11 {
      %c0_10 = arith.constant 0 : index
      %c0_11 = arith.constant 0 : index
      %12 = vector.load %arg6[%c0_10, %c0_11] : memref<128x16xf32, #tpu.memory_space<vmem>>, vector<128x16xf32>
      %cst_12 = arith.constant 0.000000e+00 : f32
      %13 = vector.broadcast %cst_12 : f32 to vector<128x16xf32>
      %14 = arith.cmpf oge, %12, %13 : vector<128x16xf32>
      %cst_13 = arith.constant 2.000000e-01 : f32
      %15 = vector.broadcast %cst_13 : f32 to vector<128x16xf32>
      %16 = arith.mulf %15, %12 : vector<128x16xf32>
      %17 = arith.select %14, %12, %16 : vector<128x16xi1>, vector<128x16xf32>
      %18 = arith.truncf %17 : vector<128x16xf32> to vector<128x16xbf16>
      %c0_14 = arith.constant 0 : index
      %c0_15 = arith.constant 0 : index
      %19 = vector.load %arg5[%c0_14, %c0_15] : memref<128x16xbf16, #tpu.memory_space<vmem>>, vector<128x16xbf16>
      tpu.vector_store %arg5[%c0_14, %c0_15], %18 {strides = array<i32>} : memref<128x16xbf16, #tpu.memory_space<vmem>>, vector<128x16xbf16>,
    } else {
    }
    return
  }
  func.func @transform_0(%arg0: i32, %arg1: i32, %arg2: i32) -> (i32, i32) {
    %c0_i32 = arith.constant 0 : i32
    return %arg0, %arg2 : i32, i32
  }
  func.func @transform_1(%arg0: i32, %arg1: i32, %arg2: i32) -> (i32, i32) {
    %c0_i32 = arith.constant 0 : i32
    return %arg2, %arg1 : i32, i32
  }
  func.func @transform_2(%arg0: i32, %arg1: i32, %arg2: i32) -> (i32, i32) {
    %c0_i32 = arith.constant 0 : i32
    return %arg0, %arg1 : i32, i32
  }
}

module attributes {stable_mosaic.version = 11 : i64} {
  func.func @_matmul_act_kernel(%arg0: i32, %arg1: i32, %arg2: i32, %arg3: memref<32x256xbf16, #tpu.memory_space<vmem>>, %arg4: memref<256x32xbf16, #tpu.memory_space<vmem>>, %arg5: memref<32x32xbf16, #tpu.memory_space<vmem>>, %arg6: memref<32x32xf32, #tpu.memory_space<vmem>>) attributes {dimension_semantics = [#tpu.dimension_semantics<parallel>, #tpu.dimension_semantics<parallel>, #tpu.dimension_semantics<arbitrary>], iteration_bounds = array<i64: 1, 1, 1>, scalar_prefetch = 0 : i64, scratch_operands = 1 : i64, tpu.core_type = #tpu.core_type<tc>, window_params = [{transform_indices = @transform_0, window_bounds = array<i64: 32, 256>}, {transform_indices = @transform_1, window_bounds = array<i64: 256, 32>}, {transform_indices = @transform_2, window_bounds = array<i64: 32, 32>}]} {
    %c0_i32 = arith.constant 0 : i32
    %0 = arith.cmpi eq, %arg2, %c0_i32 : i32
    %1 = arith.extui %0 : i1 to i32
    %c0_i32_0 = arith.constant 0 : i32
    %2 = arith.cmpi ne, %1, %c0_i32_0 : i32
    scf.if %2 {
      %cst_10 = arith.constant 0.000000e+00 : f32
      %12 = vector.broadcast %cst_10 : f32 to vector<32x32xf32>
      %c0_11 = arith.constant 0 : index
      %c0_12 = arith.constant 0 : index
      %13 = vector.load %arg6[%c0_11, %c0_12] : memref<32x32xf32, #tpu.memory_space<vmem>>, vector<32x32xf32>
      tpu.vector_store %arg6[%c0_11, %c0_12], %12 {strides = array<i32>} : memref<32x32xf32, #tpu.memory_space<vmem>>, vector<32x32xf32>,
    } else {
    }
    %c0 = arith.constant 0 : index
    %c0_1 = arith.constant 0 : index
    %3 = vector.load %arg6[%c0, %c0_1] : memref<32x32xf32, #tpu.memory_space<vmem>>, vector<32x32xf32>
    %c0_2 = arith.constant 0 : index
    %c0_3 = arith.constant 0 : index
    %4 = vector.load %arg3[%c0_2, %c0_3] : memref<32x256xbf16, #tpu.memory_space<vmem>>, vector<32x256xbf16>
    %c0_4 = arith.constant 0 : index
    %c0_5 = arith.constant 0 : index
    %5 = vector.load %arg4[%c0_4, %c0_5] : memref<256x32xbf16, #tpu.memory_space<vmem>>, vector<256x32xbf16>
    %cst = arith.constant dense<0.000000e+00> : vector<32x32xf32>
    %6 = tpu.matmul %4, %5, %cst {dimension_numbers = #tpu.dot_dimension_numbers<[1], [0], [0], [1], [0, 0, 1, 1], [], []>} : vector<32x256xbf16>, vector<256x32xbf16>, vector<32x32xf32> -> vector<32x32xf32>
    %7 = arith.addf %3, %6 : vector<32x32xf32>
    %c0_6 = arith.constant 0 : index
    %c0_7 = arith.constant 0 : index
    %8 = vector.load %arg6[%c0_6, %c0_7] : memref<32x32xf32, #tpu.memory_space<vmem>>, vector<32x32xf32>
    tpu.vector_store %arg6[%c0_6, %c0_7], %7 {strides = array<i32>} : memref<32x32xf32, #tpu.memory_space<vmem>>, vector<32x32xf32>,
    %c0_i32_8 = arith.constant 0 : i32
    %9 = arith.cmpi eq, %arg2, %c0_i32_8 : i32
    %10 = arith.extui %9 : i1 to i32
    %c0_i32_9 = arith.constant 0 : i32
    %11 = arith.cmpi ne, %10, %c0_i32_9 : i32
    scf.if %11 {
      %c0_10 = arith.constant 0 : index
      %c0_11 = arith.constant 0 : index
      %12 = vector.load %arg6[%c0_10, %c0_11] : memref<32x32xf32, #tpu.memory_space<vmem>>, vector<32x32xf32>
      %cst_12 = arith.constant 0.000000e+00 : f32
      %13 = vector.broadcast %cst_12 : f32 to vector<32x32xf32>
      %14 = arith.cmpf oge, %12, %13 : vector<32x32xf32>
      %cst_13 = arith.constant 2.000000e-01 : f32
      %15 = vector.broadcast %cst_13 : f32 to vector<32x32xf32>
      %16 = arith.mulf %15, %12 : vector<32x32xf32>
      %17 = arith.select %14, %12, %16 : vector<32x32xi1>, vector<32x32xf32>
      %18 = arith.truncf %17 : vector<32x32xf32> to vector<32x32xbf16>
      %c0_14 = arith.constant 0 : index
      %c0_15 = arith.constant 0 : index
      %19 = vector.load %arg5[%c0_14, %c0_15] : memref<32x32xbf16, #tpu.memory_space<vmem>>, vector<32x32xbf16>
      tpu.vector_store %arg5[%c0_14, %c0_15], %18 {strides = array<i32>} : memref<32x32xbf16, #tpu.memory_space<vmem>>, vector<32x32xbf16>,
    } else {
    }
    return
  }
  func.func @transform_0(%arg0: i32, %arg1: i32, %arg2: i32) -> (i32, i32) {
    %c0_i32 = arith.constant 0 : i32
    return %arg0, %arg2 : i32, i32
  }
  func.func @transform_1(%arg0: i32, %arg1: i32, %arg2: i32) -> (i32, i32) {
    %c0_i32 = arith.constant 0 : i32
    return %arg2, %arg1 : i32, i32
  }
  func.func @transform_2(%arg0: i32, %arg1: i32, %arg2: i32) -> (i32, i32) {
    %c0_i32 = arith.constant 0 : i32
    return %arg0, %arg1 : i32, i32
  }
}

module attributes {stable_mosaic.version = 11 : i64} {
  func.func @_matmul_act_kernel(%arg0: i32, %arg1: i32, %arg2: i32, %arg3: memref<8x512xbf16, #tpu.memory_space<vmem>>, %arg4: memref<512x1xbf16, #tpu.memory_space<vmem>>, %arg5: memref<8x1xf32, #tpu.memory_space<vmem>>, %arg6: memref<8x1xf32, #tpu.memory_space<vmem>>) attributes {dimension_semantics = [#tpu.dimension_semantics<parallel>, #tpu.dimension_semantics<parallel>, #tpu.dimension_semantics<arbitrary>], iteration_bounds = array<i64: 1, 1, 1>, scalar_prefetch = 0 : i64, scratch_operands = 1 : i64, tpu.core_type = #tpu.core_type<tc>, window_params = [{transform_indices = @transform_0, window_bounds = array<i64: 8, 512>}, {transform_indices = @transform_1, window_bounds = array<i64: 512, 1>}, {transform_indices = @transform_2, window_bounds = array<i64: 8, 1>}]} {
    %c0_i32 = arith.constant 0 : i32
    %0 = arith.cmpi eq, %arg2, %c0_i32 : i32
    %1 = arith.extui %0 : i1 to i32
    %c0_i32_0 = arith.constant 0 : i32
    %2 = arith.cmpi ne, %1, %c0_i32_0 : i32
    scf.if %2 {
      %cst_10 = arith.constant 0.000000e+00 : f32
      %12 = vector.broadcast %cst_10 : f32 to vector<8x1xf32>
      %c0_11 = arith.constant 0 : index
      %c0_12 = arith.constant 0 : index
      %13 = vector.load %arg6[%c0_11, %c0_12] : memref<8x1xf32, #tpu.memory_space<vmem>>, vector<8x1xf32>
      tpu.vector_store %arg6[%c0_11, %c0_12], %12 {strides = array<i32>} : memref<8x1xf32, #tpu.memory_space<vmem>>, vector<8x1xf32>,
    } else {
    }
    %c0 = arith.constant 0 : index
    %c0_1 = arith.constant 0 : index
    %3 = vector.load %arg6[%c0, %c0_1] : memref<8x1xf32, #tpu.memory_space<vmem>>, vector<8x1xf32>
    %c0_2 = arith.constant 0 : index
    %c0_3 = arith.constant 0 : index
    %4 = vector.load %arg3[%c0_2, %c0_3] : memref<8x512xbf16, #tpu.memory_space<vmem>>, vector<8x512xbf16>
    %c0_4 = arith.constant 0 : index
    %c0_5 = arith.constant 0 : index
    %5 = vector.load %arg4[%c0_4, %c0_5] : memref<512x1xbf16, #tpu.memory_space<vmem>>, vector<512x1xbf16>
    %cst = arith.constant dense<0.000000e+00> : vector<8x1xf32>
    %6 = tpu.matmul %4, %5, %cst {dimension_numbers = #tpu.dot_dimension_numbers<[1], [0], [0], [1], [0, 0, 1, 1], [], []>} : vector<8x512xbf16>, vector<512x1xbf16>, vector<8x1xf32> -> vector<8x1xf32>
    %7 = arith.addf %3, %6 : vector<8x1xf32>
    %c0_6 = arith.constant 0 : index
    %c0_7 = arith.constant 0 : index
    %8 = vector.load %arg6[%c0_6, %c0_7] : memref<8x1xf32, #tpu.memory_space<vmem>>, vector<8x1xf32>
    tpu.vector_store %arg6[%c0_6, %c0_7], %7 {strides = array<i32>} : memref<8x1xf32, #tpu.memory_space<vmem>>, vector<8x1xf32>,
    %c0_i32_8 = arith.constant 0 : i32
    %9 = arith.cmpi eq, %arg2, %c0_i32_8 : i32
    %10 = arith.extui %9 : i1 to i32
    %c0_i32_9 = arith.constant 0 : i32
    %11 = arith.cmpi ne, %10, %c0_i32_9 : i32
    scf.if %11 {
      %c0_10 = arith.constant 0 : index
      %c0_11 = arith.constant 0 : index
      %12 = vector.load %arg6[%c0_10, %c0_11] : memref<8x1xf32, #tpu.memory_space<vmem>>, vector<8x1xf32>
      %c0_12 = arith.constant 0 : index
      %c0_13 = arith.constant 0 : index
      %13 = vector.load %arg5[%c0_12, %c0_13] : memref<8x1xf32, #tpu.memory_space<vmem>>, vector<8x1xf32>
      tpu.vector_store %arg5[%c0_12, %c0_13], %12 {strides = array<i32>} : memref<8x1xf32, #tpu.memory_space<vmem>>, vector<8x1xf32>,
    } else {
    }
    return
  }
  func.func @transform_0(%arg0: i32, %arg1: i32, %arg2: i32) -> (i32, i32) {
    %c0_i32 = arith.constant 0 : i32
    return %arg0, %arg2 : i32, i32
  }
  func.func @transform_1(%arg0: i32, %arg1: i32, %arg2: i32) -> (i32, i32) {
    %c0_i32 = arith.constant 0 : i32
    return %arg2, %arg1 : i32, i32
  }
  func.func @transform_2(%arg0: i32, %arg1: i32, %arg2: i32) -> (i32, i32) {
    %c0_i32 = arith.constant 0 : i32
    return %arg0, %arg1 : i32, i32
  }
}

</mosaic_0001>

<llo_original>
// kernel: _lambda_.3
$region0: #{_lambda_.3}
  #allocation0 [shape = 'u32[]', space=smem, size = 0x4, offset = 0x4, fixed_abs, tag = 'smem constant byte address 0x4 - core index']
  #allocation1 [shape = 'u32[72,128]{1,0:T(1,128)}', space=vmem, size = 0x9000, scoped, tag = 'internal scratch']
  #allocation2 [shape = 'f32[128,16]{1,0:T(8,128)}', space=vmem, size = 0x10000, scoped, tag = 'scratch operand']
  %s0 = inlined_call_operand.vmem [shape: bf16[128,48], index: 0, kind: input, shape index: {}]
  %s1 = inlined_call_operand.vmem [shape: bf16[48,16], index: 1, kind: input, shape index: {}]
  %s2 = inlined_call_operand.vmem [shape: bf16[128,16], index: 2, kind: output, shape index: {}]
  %s3 = sld [smem:[#allocation0]]
  $region26: #{_lambda_.3} parent=0
    _
  %s5 = ssub.s32 1, %s3
  %s6 = scalar_select 0, %s5, %s3
  // Predicated region
  $region2: #{_lambda_.3} parent=0 // pred_check
    _
  $region3: #{_lambda_.3} parent=0 // pred_check_branch
    %8 = sbr.rel (0) target = $region5
  $region4: #{_lambda_.3} parent=0 // pred_region
    _
  $region5: #{_lambda_.3} parent=0 // pred_fallthru
    _
  // Predicated region
  $region6: #{_lambda_.3} parent=0 // pred_check
    _
  $region7: #{_lambda_.3} parent=0 // pred_check_branch
    %10 = sbr.rel (0) target = $region9
  $region8: #{_lambda_.3} parent=0 // pred_region
    _
  $region9: #{_lambda_.3} parent=0 // pred_fallthru
    _
  %p12 = scmp.eq.s32.totalorder 0, 0
  // Predicated region
  $region10: #{_lambda_.3} parent=0 // pred_check
    %p13 = pneg %p12
  $region11: #{_lambda_.3} parent=0 // pred_check_branch
    %15 = sbr.rel (%p13) target = $region13
  $region12: #{_lambda_.3} parent=0 // pred_region
    %vm16 = vcmask 130048
    %17 = vst.msk [vmem:[#allocation2] sm:$0xff] %vm16, 0.0
    %18 = vst.msk [vmem:[#allocation2 + $0x8] sm:$0xff] %vm16, 0.0
    %19 = vst.msk [vmem:[#allocation2 + $0x10] sm:$0xff] %vm16, 0.0
    %20 = vst.msk [vmem:[#allocation2 + $0x18] sm:$0xff] %vm16, 0.0
    %21 = vst.msk [vmem:[#allocation2 + $0x20] sm:$0xff] %vm16, 0.0
    %22 = vst.msk [vmem:[#allocation2 + $0x28] sm:$0xff] %vm16, 0.0
    %23 = vst.msk [vmem:[#allocation2 + $0x30] sm:$0xff] %vm16, 0.0
    %24 = vst.msk [vmem:[#allocation2 + $0x38] sm:$0xff] %vm16, 0.0
    %25 = vst.msk [vmem:[#allocation2 + $0x40] sm:$0xff] %vm16, 0.0
    %26 = vst.msk [vmem:[#allocation2 + $0x48] sm:$0xff] %vm16, 0.0
    %27 = vst.msk [vmem:[#allocation2 + $0x50] sm:$0xff] %vm16, 0.0
    %28 = vst.msk [vmem:[#allocation2 + $0x58] sm:$0xff] %vm16, 0.0
    %29 = vst.msk [vmem:[#allocation2 + $0x60] sm:$0xff] %vm16, 0.0
    %30 = vst.msk [vmem:[#allocation2 + $0x68] sm:$0xff] %vm16, 0.0
    %31 = vst.msk [vmem:[#allocation2 + $0x70] sm:$0xff] %vm16, 0.0
    %32 = vst.msk [vmem:[#allocation2 + $0x78] sm:$0xff] %vm16, 0.0
  $region13: #{_lambda_.3} parent=0 // pred_fallthru
    _
  %v33 = vld [vmem:[#allocation2] sm:$0xff]
  %v34 = vld [vmem:[#allocation2 + $0x8] sm:$0xff]
  %v35 = vld [vmem:[#allocation2 + $0x10] sm:$0xff]
  %v36 = vld [vmem:[#allocation2 + $0x18] sm:$0xff]
  %v37 = vld [vmem:[#allocation2 + $0x20] sm:$0xff]
  %v38 = vld [vmem:[#allocation2 + $0x28] sm:$0xff]
  %v39 = vld [vmem:[#allocation2 + $0x30] sm:$0xff]
  %v40 = vld [vmem:[#allocation2 + $0x38] sm:$0xff]
  %v41 = vld [vmem:[#allocation2 + $0x40] sm:$0xff]
  %v42 = vld [vmem:[#allocation2 + $0x48] sm:$0xff]
  %v43 = vld [vmem:[#allocation2 + $0x50] sm:$0xff]
  %v44 = vld [vmem:[#allocation2 + $0x58] sm:$0xff]
  %v45 = vld [vmem:[#allocation2 + $0x60] sm:$0xff]
  %v46 = vld [vmem:[#allocation2 + $0x68] sm:$0xff]
  %v47 = vld [vmem:[#allocation2 + $0x70] sm:$0xff]
  %v48 = vld [vmem:[#allocation2 + $0x78] sm:$0xff]
  %v49 = vld [vmem:[%s0] sm:$0xf]
  %v50 = vld [vmem:[%s0 + $0x4] sm:$0xf]
  %v51 = vld [vmem:[%s0 + $0x8] sm:$0xf]
  %v52 = vld [vmem:[%s0 + $0xc] sm:$0xf]
  %v53 = vld [vmem:[%s0 + $0x10] sm:$0xf]
  %v54 = vld [vmem:[%s0 + $0x14] sm:$0xf]
  %v55 = vld [vmem:[%s0 + $0x18] sm:$0xf]
  %v56 = vld [vmem:[%s0 + $0x1c] sm:$0xf]
  %v57 = vld [vmem:[%s0 + $0x20] sm:$0xf]
  %v58 = vld [vmem:[%s0 + $0x24] sm:$0xf]
  %v59 = vld [vmem:[%s0 + $0x28] sm:$0xf]
  %v60 = vld [vmem:[%s0 + $0x2c] sm:$0xf]
  %v61 = vld [vmem:[%s0 + $0x30] sm:$0xf]
  %v62 = vld [vmem:[%s0 + $0x34] sm:$0xf]
  %v63 = vld [vmem:[%s0 + $0x38] sm:$0xf]
  %v64 = vld [vmem:[%s0 + $0x3c] sm:$0xf]
  %v65 = vld [vmem:[%s1] sm:$0xf]
  %v66 = vld [vmem:[%s1 + $0x4] sm:$0xf]
  %v67 = vld [vmem:[%s1 + $0x8] sm:$0xf]
  %v68 = vld [vmem:[%s1 + $0xc] sm:$0xf]
  %v69 = vld [vmem:[%s1 + $0x10] sm:$0xf]
  %v70 = vld [vmem:[%s1 + $0x14] sm:$0xf]
  %v87 = vunpack.c.l.b16 %v49
  %v88 = vunpack.c.l.b16 %v50
  %v89 = vunpack.c.l.b16 %v51
  %v90 = vunpack.c.l.b16 %v52
  %v91 = vunpack.c.l.b16 %v53
  %v92 = vunpack.c.l.b16 %v54
  %v93 = vunpack.c.l.b16 %v55
  %v94 = vunpack.c.l.b16 %v56
  %v95 = vunpack.c.l.b16 %v57
  %v96 = vunpack.c.l.b16 %v58
  %v97 = vunpack.c.l.b16 %v59
  %v98 = vunpack.c.l.b16 %v60
  %v99 = vunpack.c.l.b16 %v61
  %v100 = vunpack.c.l.b16 %v62
  %v101 = vunpack.c.l.b16 %v63
  %v102 = vunpack.c.l.b16 %v64
  %v103 = vpack.c.b16 %v88, %v87
  %v104 = vpack.c.b16 %v90, %v89
  %v105 = vpack.c.b16 %v92, %v91
  %v106 = vpack.c.b16 %v94, %v93
  %v107 = vpack.c.b16 %v96, %v95
  %v108 = vpack.c.b16 %v98, %v97
  %v109 = vpack.c.b16 %v100, %v99
  %v110 = vpack.c.b16 %v102, %v101
  %v117 = vunpack.c.l.b16 %v65
  %v118 = vunpack.c.l.b16 %v66
  %v119 = vunpack.c.l.b16 %v67
  %v120 = vunpack.c.l.b16 %v68
  %v121 = vunpack.c.l.b16 %v69
  %v122 = vunpack.c.l.b16 %v70
  %v123 = vpack.c.b16 %v118, %v117
  %v124 = vpack.c.b16 %v120, %v119
  %v125 = vpack.c.b16 %v122, %v121
  %vm129 = vcmask 392192
  %v131 = vsel %vm129, %v103, 0
  %v134 = vsel %vm129, %v104, 0
  %v137 = vsel %vm129, %v105, 0
  %v140 = vsel %vm129, %v106, 0
  %v143 = vsel %vm129, %v107, 0
  %v146 = vsel %vm129, %v108, 0
  %v149 = vsel %vm129, %v109, 0
  %v152 = vsel %vm129, %v110, 0
  %154 = vmatpush.bf16.msra.mxu0 0
  %155 = vmatpush.bf16.msra.mxu0 0
  %156 = vmatpush.bf16.msra.mxu0 0
  %157 = vmatpush.bf16.msra.mxu0 0
  %158 = vmatpush.bf16.msra.mxu0 0
  %159 = vmatpush.bf16.msra.mxu0 %v125
  %160 = vmatpush.bf16.msra.mxu0 %v124
  %161 = vmatpush.bf16.msra.mxu0 %v123
  %162 = vmatmul.bf16.gmra.mxu0 %v131
  %v163 = vpop.f32.mrf.mxu0
  %v164 = vadd.f32 0.0, %v163
  %v165 = vpop.f32.mrf.mxu0
  %v166 = vadd.f32 0.0, %v165
  %167 = vmatmul.bf16.gmra.mxu0 %v134
  %v168 = vpop.f32.mrf.mxu0
  %v169 = vadd.f32 0.0, %v168
  %v170 = vpop.f32.mrf.mxu0
  %v171 = vadd.f32 0.0, %v170
  %172 = vmatmul.bf16.gmra.mxu0 %v137
  %v173 = vpop.f32.mrf.mxu0
  %v174 = vadd.f32 0.0, %v173
  %v175 = vpop.f32.mrf.mxu0
  %v176 = vadd.f32 0.0, %v175
  %177 = vmatmul.bf16.gmra.mxu0 %v140
  %v178 = vpop.f32.mrf.mxu0
  %v179 = vadd.f32 0.0, %v178
  %v180 = vpop.f32.mrf.mxu0
  %v181 = vadd.f32 0.0, %v180
  %182 = vmatmul.bf16.gmra.mxu0 %v143
  %v183 = vpop.f32.mrf.mxu0
  %v184 = vadd.f32 0.0, %v183
  %v185 = vpop.f32.mrf.mxu0
  %v186 = vadd.f32 0.0, %v185
  %187 = vmatmul.bf16.gmra.mxu0 %v146
  %v188 = vpop.f32.mrf.mxu0
  %v189 = vadd.f32 0.0, %v188
  %v190 = vpop.f32.mrf.mxu0
  %v191 = vadd.f32 0.0, %v190
  %192 = vmatmul.bf16.gmra.mxu0 %v149
  %v193 = vpop.f32.mrf.mxu0
  %v194 = vadd.f32 0.0, %v193
  %v195 = vpop.f32.mrf.mxu0
  %v196 = vadd.f32 0.0, %v195
  %197 = vmatmul.bf16.gmra.mxu0 %v152
  %v198 = vpop.f32.mrf.mxu0
  %v199 = vadd.f32 0.0, %v198
  %v200 = vpop.f32.mrf.mxu0
  %v201 = vadd.f32 0.0, %v200
  %202 = vdwg.mxu0
  %v203 = vadd.f32 %v33, %v164
  %v204 = vadd.f32 %v34, %v166
  %v205 = vadd.f32 %v35, %v169
  %v206 = vadd.f32 %v36, %v171
  %v207 = vadd.f32 %v37, %v174
  %v208 = vadd.f32 %v38, %v176
  %v209 = vadd.f32 %v39, %v179
  %v210 = vadd.f32 %v40, %v181
  %v211 = vadd.f32 %v41, %v184
  %v212 = vadd.f32 %v42, %v186
  %v213 = vadd.f32 %v43, %v189
  %v214 = vadd.f32 %v44, %v191
  %v215 = vadd.f32 %v45, %v194
  %v216 = vadd.f32 %v46, %v196
  %v217 = vadd.f32 %v47, %v199
  %v218 = vadd.f32 %v48, %v201
  %vm219 = vcmask 130048
  %220 = vst.msk [vmem:[#allocation2] sm:$0xff] %vm219, %v203
  %221 = vst.msk [vmem:[#allocation2 + $0x8] sm:$0xff] %vm219, %v204
  %222 = vst.msk [vmem:[#allocation2 + $0x10] sm:$0xff] %vm219, %v205
  %223 = vst.msk [vmem:[#allocation2 + $0x18] sm:$0xff] %vm219, %v206
  %224 = vst.msk [vmem:[#allocation2 + $0x20] sm:$0xff] %vm219, %v207
  %225 = vst.msk [vmem:[#allocation2 + $0x28] sm:$0xff] %vm219, %v208
  %226 = vst.msk [vmem:[#allocation2 + $0x30] sm:$0xff] %vm219, %v209
  %227 = vst.msk [vmem:[#allocation2 + $0x38] sm:$0xff] %vm219, %v210
  %228 = vst.msk [vmem:[#allocation2 + $0x40] sm:$0xff] %vm219, %v211
  %229 = vst.msk [vmem:[#allocation2 + $0x48] sm:$0xff] %vm219, %v212
  %230 = vst.msk [vmem:[#allocation2 + $0x50] sm:$0xff] %vm219, %v213
  %231 = vst.msk [vmem:[#allocation2 + $0x58] sm:$0xff] %vm219, %v214
  %232 = vst.msk [vmem:[#allocation2 + $0x60] sm:$0xff] %vm219, %v215
  %233 = vst.msk [vmem:[#allocation2 + $0x68] sm:$0xff] %vm219, %v216
  %234 = vst.msk [vmem:[#allocation2 + $0x70] sm:$0xff] %vm219, %v217
  %235 = vst.msk [vmem:[#allocation2 + $0x78] sm:$0xff] %vm219, %v218
  // Predicated region
  $region14: #{_lambda_.3} parent=0 // pred_check
    %p236 = pneg %p12
  $region15: #{_lambda_.3} parent=0 // pred_check_branch
    %238 = sbr.rel (%p236) target = $region17
  $region16: #{_lambda_.3} parent=0 // pred_region
    %v239 = vld [vmem:[#allocation2] sm:$0xff]
    %v240 = vld [vmem:[#allocation2 + $0x8] sm:$0xff]
    %v241 = vld [vmem:[#allocation2 + $0x10] sm:$0xff]
    %v242 = vld [vmem:[#allocation2 + $0x18] sm:$0xff]
    %v243 = vld [vmem:[#allocation2 + $0x20] sm:$0xff]
    %v244 = vld [vmem:[#allocation2 + $0x28] sm:$0xff]
    %v245 = vld [vmem:[#allocation2 + $0x30] sm:$0xff]
    %v246 = vld [vmem:[#allocation2 + $0x38] sm:$0xff]
    %v247 = vld [vmem:[#allocation2 + $0x40] sm:$0xff]
    %v248 = vld [vmem:[#allocation2 + $0x48] sm:$0xff]
    %v249 = vld [vmem:[#allocation2 + $0x50] sm:$0xff]
    %v250 = vld [vmem:[#allocation2 + $0x58] sm:$0xff]
    %v251 = vld [vmem:[#allocation2 + $0x60] sm:$0xff]
    %v252 = vld [vmem:[#allocation2 + $0x68] sm:$0xff]
    %v253 = vld [vmem:[#allocation2 + $0x70] sm:$0xff]
    %v254 = vld [vmem:[#allocation2 + $0x78] sm:$0xff]
    %vm255 = vcmp.ge.f32.partialorder %v239, 0.0
    %vm256 = vcmp.ge.f32.partialorder %v240, 0.0
    %vm257 = vcmp.ge.f32.partialorder %v241, 0.0
    %vm258 = vcmp.ge.f32.partialorder %v242, 0.0
    %vm259 = vcmp.ge.f32.partialorder %v243, 0.0
    %vm260 = vcmp.ge.f32.partialorder %v244, 0.0
    %vm261 = vcmp.ge.f32.partialorder %v245, 0.0
    %vm262 = vcmp.ge.f32.partialorder %v246, 0.0
    %vm263 = vcmp.ge.f32.partialorder %v247, 0.0
    %vm264 = vcmp.ge.f32.partialorder %v248, 0.0
    %vm265 = vcmp.ge.f32.partialorder %v249, 0.0
    %vm266 = vcmp.ge.f32.partialorder %v250, 0.0
    %vm267 = vcmp.ge.f32.partialorder %v251, 0.0
    %vm268 = vcmp.ge.f32.partialorder %v252, 0.0
    %vm269 = vcmp.ge.f32.partialorder %v253, 0.0
    %vm270 = vcmp.ge.f32.partialorder %v254, 0.0
    %v271 = vmul.f32 %v239, 0.2
    %v272 = vmul.f32 %v240, 0.2
    %v273 = vmul.f32 %v241, 0.2
    %v274 = vmul.f32 %v242, 0.2
    %v275 = vmul.f32 %v243, 0.2
    %v276 = vmul.f32 %v244, 0.2
    %v277 = vmul.f32 %v245, 0.2
    %v278 = vmul.f32 %v246, 0.2
    %v279 = vmul.f32 %v247, 0.2
    %v280 = vmul.f32 %v248, 0.2
    %v281 = vmul.f32 %v249, 0.2
    %v282 = vmul.f32 %v250, 0.2
    %v283 = vmul.f32 %v251, 0.2
    %v284 = vmul.f32 %v252, 0.2
    %v285 = vmul.f32 %v253, 0.2
    %v286 = vmul.f32 %v254, 0.2
    %v287 = vsel %vm255, %v239, %v271
    %v288 = vsel %vm256, %v240, %v272
    %v289 = vsel %vm257, %v241, %v273
    %v290 = vsel %vm258, %v242, %v274
    %v291 = vsel %vm259, %v243, %v275
    %v292 = vsel %vm260, %v244, %v276
    %v293 = vsel %vm261, %v245, %v277
    %v294 = vsel %vm262, %v246, %v278
    %v295 = vsel %vm263, %v247, %v279
    %v296 = vsel %vm264, %v248, %v280
    %v297 = vsel %vm265, %v249, %v281
    %v298 = vsel %vm266, %v250, %v282
    %v299 = vsel %vm267, %v251, %v283
    %v300 = vsel %vm268, %v252, %v284
    %v301 = vsel %vm269, %v253, %v285
    %v302 = vsel %vm270, %v254, %v286
    %v303 = vpack.c.bf16 %v287, %v287
    %v304 = vpack.c.bf16 %v288, %v288
    %v305 = vpack.c.bf16 %v289, %v289
    %v306 = vpack.c.bf16 %v290, %v290
    %v307 = vpack.c.bf16 %v291, %v291
    %v308 = vpack.c.bf16 %v292, %v292
    %v309 = vpack.c.bf16 %v293, %v293
    %v310 = vpack.c.bf16 %v294, %v294
    %v311 = vpack.c.bf16 %v295, %v295
    %v312 = vpack.c.bf16 %v296, %v296
    %v313 = vpack.c.bf16 %v297, %v297
    %v314 = vpack.c.bf16 %v298, %v298
    %v315 = vpack.c.bf16 %v299, %v299
    %v316 = vpack.c.bf16 %v300, %v300
    %v317 = vpack.c.bf16 %v301, %v301
    %v318 = vpack.c.bf16 %v302, %v302
    %vm319 = vcmask 125952
    %320 = vst.msk [vmem:[%s2] sm:$0xf] %vm319, %v303
    %321 = vst.msk [vmem:[%s2 + $0x4] sm:$0xf] %vm319, %v304
    %322 = vst.msk [vmem:[%s2 + $0x8] sm:$0xf] %vm319, %v305
    %323 = vst.msk [vmem:[%s2 + $0xc] sm:$0xf] %vm319, %v306
    %324 = vst.msk [vmem:[%s2 + $0x10] sm:$0xf] %vm319, %v307
    %325 = vst.msk [vmem:[%s2 + $0x14] sm:$0xf] %vm319, %v308
    %326 = vst.msk [vmem:[%s2 + $0x18] sm:$0xf] %vm319, %v309
    %327 = vst.msk [vmem:[%s2 + $0x1c] sm:$0xf] %vm319, %v310
    %328 = vst.msk [vmem:[%s2 + $0x20] sm:$0xf] %vm319, %v311
    %329 = vst.msk [vmem:[%s2 + $0x24] sm:$0xf] %vm319, %v312
    %330 = vst.msk [vmem:[%s2 + $0x28] sm:$0xf] %vm319, %v313
    %331 = vst.msk [vmem:[%s2 + $0x2c] sm:$0xf] %vm319, %v314
    %332 = vst.msk [vmem:[%s2 + $0x30] sm:$0xf] %vm319, %v315
    %333 = vst.msk [vmem:[%s2 + $0x34] sm:$0xf] %vm319, %v316
    %334 = vst.msk [vmem:[%s2 + $0x38] sm:$0xf] %vm319, %v317
    %335 = vst.msk [vmem:[%s2 + $0x3c] sm:$0xf] %vm319, %v318
  $region17: #{_lambda_.3} parent=0 // pred_fallthru
    _
  // Predicated region
  $region18: #{_lambda_.3} parent=0 // pred_check
    _
  $region19: #{_lambda_.3} parent=0 // pred_check_branch
    %337 = sbr.rel (0) target = $region21
  $region20: #{_lambda_.3} parent=0 // pred_region
    _
  $region21: #{_lambda_.3} parent=0 // pred_fallthru
    _
  // Predicated region
  $region22: #{_lambda_.3} parent=0 // pred_check
    _
  $region23: #{_lambda_.3} parent=0 // pred_check_branch
    %339 = sbr.rel (0) target = $region25
  $region24: #{_lambda_.3} parent=0 // pred_region
    _
  $region25: #{_lambda_.3} parent=0 // pred_fallthru
    _

// kernel: _lambda_.4
$region0: #{_lambda_.4}
  #allocation0 [shape = 'u32[]', space=smem, size = 0x4, offset = 0x4, fixed_abs, tag = 'smem constant byte address 0x4 - core index']
  #allocation1 [shape = 'u32[72,128]{1,0:T(1,128)}', space=vmem, size = 0x9000, scoped, tag = 'internal scratch']
  #allocation2 [shape = 'f32[32,32]{1,0:T(8,128)}', space=vmem, size = 0x4000, scoped, tag = 'scratch operand']
  %s0 = inlined_call_operand.vmem [shape: bf16[32,256], index: 0, kind: input, shape index: {}]
  %s1 = inlined_call_operand.vmem [shape: bf16[256,32], index: 1, kind: input, shape index: {}]
  %s2 = inlined_call_operand.vmem [shape: bf16[32,32], index: 2, kind: output, shape index: {}]
  %s3 = sld [smem:[#allocation0]]
  $region26: #{_lambda_.4} parent=0
    _
  %s5 = ssub.s32 1, %s3
  %s6 = scalar_select 0, %s5, %s3
  // Predicated region
  $region2: #{_lambda_.4} parent=0 // pred_check
    _
  $region3: #{_lambda_.4} parent=0 // pred_check_branch
    %8 = sbr.rel (0) target = $region5
  $region4: #{_lambda_.4} parent=0 // pred_region
    _
  $region5: #{_lambda_.4} parent=0 // pred_fallthru
    _
  // Predicated region
  $region6: #{_lambda_.4} parent=0 // pred_check
    _
  $region7: #{_lambda_.4} parent=0 // pred_check_branch
    %10 = sbr.rel (0) target = $region9
  $region8: #{_lambda_.4} parent=0 // pred_region
    _
  $region9: #{_lambda_.4} parent=0 // pred_fallthru
    _
  %p11 = scmp.eq.s32.totalorder 0, 0
  // Predicated region
  $region10: #{_lambda_.4} parent=0 // pred_check
    %p12 = pneg %p11
  $region11: #{_lambda_.4} parent=0 // pred_check_branch
    %14 = sbr.rel (%p12) target = $region13
  $region12: #{_lambda_.4} parent=0 // pred_region
    %vm15 = vcmask 261120
    %16 = vst.msk [vmem:[#allocation2] sm:$0xff] %vm15, 0.0
    %17 = vst.msk [vmem:[#allocation2 + $0x8] sm:$0xff] %vm15, 0.0
    %18 = vst.msk [vmem:[#allocation2 + $0x10] sm:$0xff] %vm15, 0.0
    %19 = vst.msk [vmem:[#allocation2 + $0x18] sm:$0xff] %vm15, 0.0
  $region13: #{_lambda_.4} parent=0 // pred_fallthru
    _
  %v20 = vld [vmem:[#allocation2] sm:$0xff]
  %v21 = vld [vmem:[#allocation2 + $0x8] sm:$0xff]
  %v22 = vld [vmem:[#allocation2 + $0x10] sm:$0xff]
  %v23 = vld [vmem:[#allocation2 + $0x18] sm:$0xff]
  %v24 = vld [vmem:[%s0] sm:$0xff]
  %v25 = vld [vmem:[%s0 + $0x8] sm:$0xff]
  %v26 = vld [vmem:[%s0 + $0x10] sm:$0xff]
  %v27 = vld [vmem:[%s0 + $0x18] sm:$0xff]
  %v28 = vld [vmem:[%s1] sm:$0xf]
  %v29 = vld [vmem:[%s1 + $0x4] sm:$0xf]
  %v30 = vld [vmem:[%s1 + $0x8] sm:$0xf]
  %v31 = vld [vmem:[%s1 + $0xc] sm:$0xf]
  %v32 = vld [vmem:[%s1 + $0x10] sm:$0xf]
  %v33 = vld [vmem:[%s1 + $0x14] sm:$0xf]
  %v34 = vld [vmem:[%s1 + $0x18] sm:$0xf]
  %v35 = vld [vmem:[%s1 + $0x1c] sm:$0xf]
  %v36 = vld [vmem:[%s1 + $0x20] sm:$0xf]
  %v37 = vld [vmem:[%s1 + $0x24] sm:$0xf]
  %v38 = vld [vmem:[%s1 + $0x28] sm:$0xf]
  %v39 = vld [vmem:[%s1 + $0x2c] sm:$0xf]
  %v40 = vld [vmem:[%s1 + $0x30] sm:$0xf]
  %v41 = vld [vmem:[%s1 + $0x34] sm:$0xf]
  %v42 = vld [vmem:[%s1 + $0x38] sm:$0xf]
  %v43 = vld [vmem:[%s1 + $0x3c] sm:$0xf]
  %v44 = vld [vmem:[%s1 + $0x40] sm:$0xf]
  %v45 = vld [vmem:[%s1 + $0x44] sm:$0xf]
  %v46 = vld [vmem:[%s1 + $0x48] sm:$0xf]
  %v47 = vld [vmem:[%s1 + $0x4c] sm:$0xf]
  %v48 = vld [vmem:[%s1 + $0x50] sm:$0xf]
  %v49 = vld [vmem:[%s1 + $0x54] sm:$0xf]
  %v50 = vld [vmem:[%s1 + $0x58] sm:$0xf]
  %v51 = vld [vmem:[%s1 + $0x5c] sm:$0xf]
  %v52 = vld [vmem:[%s1 + $0x60] sm:$0xf]
  %v53 = vld [vmem:[%s1 + $0x64] sm:$0xf]
  %v54 = vld [vmem:[%s1 + $0x68] sm:$0xf]
  %v55 = vld [vmem:[%s1 + $0x6c] sm:$0xf]
  %v56 = vld [vmem:[%s1 + $0x70] sm:$0xf]
  %v57 = vld [vmem:[%s1 + $0x74] sm:$0xf]
  %v58 = vld [vmem:[%s1 + $0x78] sm:$0xf]
  %v59 = vld [vmem:[%s1 + $0x7c] sm:$0xf]
  %v64 = vunpack.c.l.b16 %v24
  %v65 = vunpack.c.h.b16 %v24
  %v66 = vunpack.c.l.b16 %v25
  %v67 = vunpack.c.h.b16 %v25
  %v68 = vunpack.c.l.b16 %v26
  %v69 = vunpack.c.h.b16 %v26
  %v70 = vunpack.c.l.b16 %v27
  %v71 = vunpack.c.h.b16 %v27
  %v72 = vpack.c.b16 %v66, %v64
  %v73 = vpack.c.b16 %v67, %v65
  %v74 = vpack.c.b16 %v70, %v68
  %v75 = vpack.c.b16 %v71, %v69
  %v112 = vunpack.c.l.b16 %v28
  %v113 = vunpack.c.l.b16 %v29
  %v114 = vunpack.c.l.b16 %v30
  %v115 = vunpack.c.l.b16 %v31
  %v116 = vunpack.c.l.b16 %v32
  %v117 = vunpack.c.l.b16 %v33
  %v118 = vunpack.c.l.b16 %v34
  %v119 = vunpack.c.l.b16 %v35
  %v120 = vunpack.c.l.b16 %v36
  %v121 = vunpack.c.l.b16 %v37
  %v122 = vunpack.c.l.b16 %v38
  %v123 = vunpack.c.l.b16 %v39
  %v124 = vunpack.c.l.b16 %v40
  %v125 = vunpack.c.l.b16 %v41
  %v126 = vunpack.c.l.b16 %v42
  %v127 = vunpack.c.l.b16 %v43
  %v128 = vunpack.c.l.b16 %v44
  %v129 = vunpack.c.l.b16 %v45
  %v130 = vunpack.c.l.b16 %v46
  %v131 = vunpack.c.l.b16 %v47
  %v132 = vunpack.c.l.b16 %v48
  %v133 = vunpack.c.l.b16 %v49
  %v134 = vunpack.c.l.b16 %v50
  %v135 = vunpack.c.l.b16 %v51
  %v136 = vunpack.c.l.b16 %v52
  %v137 = vunpack.c.l.b16 %v53
  %v138 = vunpack.c.l.b16 %v54
  %v139 = vunpack.c.l.b16 %v55
  %v140 = vunpack.c.l.b16 %v56
  %v141 = vunpack.c.l.b16 %v57
  %v142 = vunpack.c.l.b16 %v58
  %v143 = vunpack.c.l.b16 %v59
  %v144 = vpack.c.b16 %v113, %v112
  %v145 = vpack.c.b16 %v115, %v114
  %v146 = vpack.c.b16 %v117, %v116
  %v147 = vpack.c.b16 %v119, %v118
  %v148 = vpack.c.b16 %v121, %v120
  %v149 = vpack.c.b16 %v123, %v122
  %v150 = vpack.c.b16 %v125, %v124
  %v151 = vpack.c.b16 %v127, %v126
  %v152 = vpack.c.b16 %v129, %v128
  %v153 = vpack.c.b16 %v131, %v130
  %v154 = vpack.c.b16 %v133, %v132
  %v155 = vpack.c.b16 %v135, %v134
  %v156 = vpack.c.b16 %v137, %v136
  %v157 = vpack.c.b16 %v139, %v138
  %v158 = vpack.c.b16 %v141, %v140
  %v159 = vpack.c.b16 %v143, %v142
  %176 = vmatpush.bf16.msra.mxu0 %v151
  %177 = vmatpush.bf16.msra.mxu0 %v150
  %178 = vmatpush.bf16.msra.mxu0 %v149
  %179 = vmatpush.bf16.msra.mxu0 %v148
  %180 = vmatpush.bf16.msra.mxu0 %v147
  %181 = vmatpush.bf16.msra.mxu0 %v146
  %182 = vmatpush.bf16.msra.mxu0 %v145
  %183 = vmatpush.bf16.msra.mxu0 %v144
  %184 = vmatmul.bf16.gmra.mxu0 %v72
  %v185 = vpop.f32.mrf.mxu0
  %v186 = vadd.f32 0.0, %v185
  %v187 = vpop.f32.mrf.mxu0
  %v188 = vadd.f32 0.0, %v187
  %189 = vmatmul.bf16.gmra.mxu0 %v74
  %v190 = vpop.f32.mrf.mxu0
  %v191 = vadd.f32 0.0, %v190
  %v192 = vpop.f32.mrf.mxu0
  %v193 = vadd.f32 0.0, %v192
  %194 = vdwg.mxu0
  %195 = vmatpush.bf16.msra.mxu0 %v159
  %196 = vmatpush.bf16.msra.mxu0 %v158
  %197 = vmatpush.bf16.msra.mxu0 %v157
  %198 = vmatpush.bf16.msra.mxu0 %v156
  %199 = vmatpush.bf16.msra.mxu0 %v155
  %200 = vmatpush.bf16.msra.mxu0 %v154
  %201 = vmatpush.bf16.msra.mxu0 %v153
  %202 = vmatpush.bf16.msra.mxu0 %v152
  %203 = vmatmul.bf16.gmra.mxu0 %v73
  %v204 = vpop.f32.mrf.mxu0
  %v205 = vadd.f32 %v186, %v204
  %v206 = vpop.f32.mrf.mxu0
  %v207 = vadd.f32 %v188, %v206
  %208 = vmatmul.bf16.gmra.mxu0 %v75
  %v209 = vpop.f32.mrf.mxu0
  %v210 = vadd.f32 %v191, %v209
  %v211 = vpop.f32.mrf.mxu0
  %v212 = vadd.f32 %v193, %v211
  %213 = vdwg.mxu0
  %v214 = vadd.f32 %v20, %v205
  %v215 = vadd.f32 %v21, %v207
  %v216 = vadd.f32 %v22, %v210
  %v217 = vadd.f32 %v23, %v212
  %vm218 = vcmask 261120
  %219 = vst.msk [vmem:[#allocation2] sm:$0xff] %vm218, %v214
  %220 = vst.msk [vmem:[#allocation2 + $0x8] sm:$0xff] %vm218, %v215
  %221 = vst.msk [vmem:[#allocation2 + $0x10] sm:$0xff] %vm218, %v216
  %222 = vst.msk [vmem:[#allocation2 + $0x18] sm:$0xff] %vm218, %v217
  // Predicated region
  $region14: #{_lambda_.4} parent=0 // pred_check
    %p223 = pneg %p11
  $region15: #{_lambda_.4} parent=0 // pred_check_branch
    %225 = sbr.rel (%p223) target = $region17
  $region16: #{_lambda_.4} parent=0 // pred_region
    %v226 = vld [vmem:[#allocation2] sm:$0xff]
    %v227 = vld [vmem:[#allocation2 + $0x8] sm:$0xff]
    %v228 = vld [vmem:[#allocation2 + $0x10] sm:$0xff]
    %v229 = vld [vmem:[#allocation2 + $0x18] sm:$0xff]
    %vm230 = vcmp.ge.f32.partialorder %v226, 0.0
    %vm231 = vcmp.ge.f32.partialorder %v227, 0.0
    %vm232 = vcmp.ge.f32.partialorder %v228, 0.0
    %vm233 = vcmp.ge.f32.partialorder %v229, 0.0
    %v234 = vmul.f32 %v226, 0.2
    %v235 = vmul.f32 %v227, 0.2
    %v236 = vmul.f32 %v228, 0.2
    %v237 = vmul.f32 %v229, 0.2
    %v238 = vsel %vm230, %v226, %v234
    %v239 = vsel %vm231, %v227, %v235
    %v240 = vsel %vm232, %v228, %v236
    %v241 = vsel %vm233, %v229, %v237
    %v242 = vpack.c.bf16 %v238, %v238
    %v243 = vpack.c.bf16 %v239, %v239
    %v244 = vpack.c.bf16 %v240, %v240
    %v245 = vpack.c.bf16 %v241, %v241
    %vm246 = vcmask 257024
    %247 = vst.msk [vmem:[%s2] sm:$0xf] %vm246, %v242
    %248 = vst.msk [vmem:[%s2 + $0x4] sm:$0xf] %vm246, %v243
    %249 = vst.msk [vmem:[%s2 + $0x8] sm:$0xf] %vm246, %v244
    %250 = vst.msk [vmem:[%s2 + $0xc] sm:$0xf] %vm246, %v245
  $region17: #{_lambda_.4} parent=0 // pred_fallthru
    _
  // Predicated region
  $region18: #{_lambda_.4} parent=0 // pred_check
    _
  $region19: #{_lambda_.4} parent=0 // pred_check_branch
    %252 = sbr.rel (0) target = $region21
  $region20: #{_lambda_.4} parent=0 // pred_region
    _
  $region21: #{_lambda_.4} parent=0 // pred_fallthru
    _
  // Predicated region
  $region22: #{_lambda_.4} parent=0 // pred_check
    _
  $region23: #{_lambda_.4} parent=0 // pred_check_branch
    %254 = sbr.rel (0) target = $region25
  $region24: #{_lambda_.4} parent=0 // pred_region
    _
  $region25: #{_lambda_.4} parent=0 // pred_fallthru
    _

// kernel: _lambda_.5
$region0: #{_lambda_.5}
  #allocation0 [shape = 'u32[]', space=smem, size = 0x4, offset = 0x4, fixed_abs, tag = 'smem constant byte address 0x4 - core index']
  #allocation1 [shape = 'u32[72,128]{1,0:T(1,128)}', space=vmem, size = 0x9000, scoped, tag = 'internal scratch']
  #allocation2 [shape = 'f32[8,1]{1,0:T(8,128)}', space=vmem, size = 0x1000, scoped, tag = 'scratch operand']
  %s0 = inlined_call_operand.vmem [shape: bf16[8,512], index: 0, kind: input, shape index: {}]
  %s1 = inlined_call_operand.vmem [shape: bf16[512,1], index: 1, kind: input, shape index: {}]
  %s2 = inlined_call_operand.vmem [shape: f32[8,1], index: 2, kind: output, shape index: {}]
  %s3 = sld [smem:[#allocation0]]
  $region26: #{_lambda_.5} parent=0
    _
  %s5 = ssub.s32 1, %s3
  %s6 = scalar_select 0, %s5, %s3
  // Predicated region
  $region2: #{_lambda_.5} parent=0 // pred_check
    _
  $region3: #{_lambda_.5} parent=0 // pred_check_branch
    %8 = sbr.rel (0) target = $region5
  $region4: #{_lambda_.5} parent=0 // pred_region
    _
  $region5: #{_lambda_.5} parent=0 // pred_fallthru
    _
  // Predicated region
  $region6: #{_lambda_.5} parent=0 // pred_check
    _
  $region7: #{_lambda_.5} parent=0 // pred_check_branch
    %10 = sbr.rel (0) target = $region9
  $region8: #{_lambda_.5} parent=0 // pred_region
    _
  $region9: #{_lambda_.5} parent=0 // pred_fallthru
    _
  %p11 = scmp.eq.s32.totalorder 0, 0
  // Predicated region
  $region10: #{_lambda_.5} parent=0 // pred_check
    %p12 = pneg %p11
  $region11: #{_lambda_.5} parent=0 // pred_check_branch
    %14 = sbr.rel (%p12) target = $region13
  $region12: #{_lambda_.5} parent=0 // pred_region
    %vm15 = vcmask 7168
    %16 = vst.msk [vmem:[#allocation2] sm:$0xff] %vm15, 0.0
  $region13: #{_lambda_.5} parent=0 // pred_fallthru
    _
  %v17 = vld [vmem:[#allocation2] sm:$0xff]
  %v18 = vld [vmem:[%s0] sm:$0xff]
  %v19 = vld [vmem:[%s0 + $0x8] sm:$0xff]
  %v20 = vld [vmem:[%s1] sm:$0xf]
  %v21 = vld [vmem:[%s1 + $0x4] sm:$0xf]
  %v22 = vld [vmem:[%s1 + $0x8] sm:$0xf]
  %v23 = vld [vmem:[%s1 + $0xc] sm:$0xf]
  %v24 = vld [vmem:[%s1 + $0x10] sm:$0xf]
  %v25 = vld [vmem:[%s1 + $0x14] sm:$0xf]
  %v26 = vld [vmem:[%s1 + $0x18] sm:$0xf]
  %v27 = vld [vmem:[%s1 + $0x1c] sm:$0xf]
  %v28 = vld [vmem:[%s1 + $0x20] sm:$0xf]
  %v29 = vld [vmem:[%s1 + $0x24] sm:$0xf]
  %v30 = vld [vmem:[%s1 + $0x28] sm:$0xf]
  %v31 = vld [vmem:[%s1 + $0x2c] sm:$0xf]
  %v32 = vld [vmem:[%s1 + $0x30] sm:$0xf]
  %v33 = vld [vmem:[%s1 + $0x34] sm:$0xf]
  %v34 = vld [vmem:[%s1 + $0x38] sm:$0xf]
  %v35 = vld [vmem:[%s1 + $0x3c] sm:$0xf]
  %v36 = vld [vmem:[%s1 + $0x40] sm:$0xf]
  %v37 = vld [vmem:[%s1 + $0x44] sm:$0xf]
  %v38 = vld [vmem:[%s1 + $0x48] sm:$0xf]
  %v39 = vld [vmem:[%s1 + $0x4c] sm:$0xf]
  %v40 = vld [vmem:[%s1 + $0x50] sm:$0xf]
  %v41 = vld [vmem:[%s1 + $0x54] sm:$0xf]
  %v42 = vld [vmem:[%s1 + $0x58] sm:$0xf]
  %v43 = vld [vmem:[%s1 + $0x5c] sm:$0xf]
  %v44 = vld [vmem:[%s1 + $0x60] sm:$0xf]
  %v45 = vld [vmem:[%s1 + $0x64] sm:$0xf]
  %v46 = vld [vmem:[%s1 + $0x68] sm:$0xf]
  %v47 = vld [vmem:[%s1 + $0x6c] sm:$0xf]
  %v48 = vld [vmem:[%s1 + $0x70] sm:$0xf]
  %v49 = vld [vmem:[%s1 + $0x74] sm:$0xf]
  %v50 = vld [vmem:[%s1 + $0x78] sm:$0xf]
  %v51 = vld [vmem:[%s1 + $0x7c] sm:$0xf]
  %v52 = vld [vmem:[%s1 + $0x80] sm:$0xf]
  %v53 = vld [vmem:[%s1 + $0x84] sm:$0xf]
  %v54 = vld [vmem:[%s1 + $0x88] sm:$0xf]
  %v55 = vld [vmem:[%s1 + $0x8c] sm:$0xf]
  %v56 = vld [vmem:[%s1 + $0x90] sm:$0xf]
  %v57 = vld [vmem:[%s1 + $0x94] sm:$0xf]
  %v58 = vld [vmem:[%s1 + $0x98] sm:$0xf]
  %v59 = vld [vmem:[%s1 + $0x9c] sm:$0xf]
  %v60 = vld [vmem:[%s1 + $0xa0] sm:$0xf]
  %v61 = vld [vmem:[%s1 + $0xa4] sm:$0xf]
  %v62 = vld [vmem:[%s1 + $0xa8] sm:$0xf]
  %v63 = vld [vmem:[%s1 + $0xac] sm:$0xf]
  %v64 = vld [vmem:[%s1 + $0xb0] sm:$0xf]
  %v65 = vld [vmem:[%s1 + $0xb4] sm:$0xf]
  %v66 = vld [vmem:[%s1 + $0xb8] sm:$0xf]
  %v67 = vld [vmem:[%s1 + $0xbc] sm:$0xf]
  %v68 = vld [vmem:[%s1 + $0xc0] sm:$0xf]
  %v69 = vld [vmem:[%s1 + $0xc4] sm:$0xf]
  %v70 = vld [vmem:[%s1 + $0xc8] sm:$0xf]
  %v71 = vld [vmem:[%s1 + $0xcc] sm:$0xf]
  %v72 = vld [vmem:[%s1 + $0xd0] sm:$0xf]
  %v73 = vld [vmem:[%s1 + $0xd4] sm:$0xf]
  %v74 = vld [vmem:[%s1 + $0xd8] sm:$0xf]
  %v75 = vld [vmem:[%s1 + $0xdc] sm:$0xf]
  %v76 = vld [vmem:[%s1 + $0xe0] sm:$0xf]
  %v77 = vld [vmem:[%s1 + $0xe4] sm:$0xf]
  %v78 = vld [vmem:[%s1 + $0xe8] sm:$0xf]
  %v79 = vld [vmem:[%s1 + $0xec] sm:$0xf]
  %v80 = vld [vmem:[%s1 + $0xf0] sm:$0xf]
  %v81 = vld [vmem:[%s1 + $0xf4] sm:$0xf]
  %v82 = vld [vmem:[%s1 + $0xf8] sm:$0xf]
  %v83 = vld [vmem:[%s1 + $0xfc] sm:$0xf]
  %v86 = vunpack.c.l.b16 %v18
  %v87 = vunpack.c.h.b16 %v18
  %v88 = vunpack.c.l.b16 %v19
  %v89 = vunpack.c.h.b16 %v19
  %v90 = vpack.c.b16 %v86, %v86
  %v91 = vpack.c.b16 %v87, %v87
  %v92 = vpack.c.b16 %v88, %v88
  %v93 = vpack.c.b16 %v89, %v89
  %v162 = vunpack.c.l.b16 %v20
  %v163 = vunpack.c.l.b16 %v21
  %v164 = vunpack.c.l.b16 %v22
  %v165 = vunpack.c.l.b16 %v23
  %v166 = vunpack.c.l.b16 %v24
  %v167 = vunpack.c.l.b16 %v25
  %v168 = vunpack.c.l.b16 %v26
  %v169 = vunpack.c.l.b16 %v27
  %v170 = vunpack.c.l.b16 %v28
  %v171 = vunpack.c.l.b16 %v29
  %v172 = vunpack.c.l.b16 %v30
  %v173 = vunpack.c.l.b16 %v31
  %v174 = vunpack.c.l.b16 %v32
  %v175 = vunpack.c.l.b16 %v33
  %v176 = vunpack.c.l.b16 %v34
  %v177 = vunpack.c.l.b16 %v35
  %v178 = vunpack.c.l.b16 %v36
  %v179 = vunpack.c.l.b16 %v37
  %v180 = vunpack.c.l.b16 %v38
  %v181 = vunpack.c.l.b16 %v39
  %v182 = vunpack.c.l.b16 %v40
  %v183 = vunpack.c.l.b16 %v41
  %v184 = vunpack.c.l.b16 %v42
  %v185 = vunpack.c.l.b16 %v43
  %v186 = vunpack.c.l.b16 %v44
  %v187 = vunpack.c.l.b16 %v45
  %v188 = vunpack.c.l.b16 %v46
  %v189 = vunpack.c.l.b16 %v47
  %v190 = vunpack.c.l.b16 %v48
  %v191 = vunpack.c.l.b16 %v49
  %v192 = vunpack.c.l.b16 %v50
  %v193 = vunpack.c.l.b16 %v51
  %v194 = vunpack.c.l.b16 %v52
  %v195 = vunpack.c.l.b16 %v53
  %v196 = vunpack.c.l.b16 %v54
  %v197 = vunpack.c.l.b16 %v55
  %v198 = vunpack.c.l.b16 %v56
  %v199 = vunpack.c.l.b16 %v57
  %v200 = vunpack.c.l.b16 %v58
  %v201 = vunpack.c.l.b16 %v59
  %v202 = vunpack.c.l.b16 %v60
  %v203 = vunpack.c.l.b16 %v61
  %v204 = vunpack.c.l.b16 %v62
  %v205 = vunpack.c.l.b16 %v63
  %v206 = vunpack.c.l.b16 %v64
  %v207 = vunpack.c.l.b16 %v65
  %v208 = vunpack.c.l.b16 %v66
  %v209 = vunpack.c.l.b16 %v67
  %v210 = vunpack.c.l.b16 %v68
  %v211 = vunpack.c.l.b16 %v69
  %v212 = vunpack.c.l.b16 %v70
  %v213 = vunpack.c.l.b16 %v71
  %v214 = vunpack.c.l.b16 %v72
  %v215 = vunpack.c.l.b16 %v73
  %v216 = vunpack.c.l.b16 %v74
  %v217 = vunpack.c.l.b16 %v75
  %v218 = vunpack.c.l.b16 %v76
  %v219 = vunpack.c.l.b16 %v77
  %v220 = vunpack.c.l.b16 %v78
  %v221 = vunpack.c.l.b16 %v79
  %v222 = vunpack.c.l.b16 %v80
  %v223 = vunpack.c.l.b16 %v81
  %v224 = vunpack.c.l.b16 %v82
  %v225 = vunpack.c.l.b16 %v83
  %v226 = vpack.c.b16 %v163, %v162
  %v227 = vpack.c.b16 %v165, %v164
  %v228 = vpack.c.b16 %v167, %v166
  %v229 = vpack.c.b16 %v169, %v168
  %v230 = vpack.c.b16 %v171, %v170
  %v231 = vpack.c.b16 %v173, %v172
  %v232 = vpack.c.b16 %v175, %v174
  %v233 = vpack.c.b16 %v177, %v176
  %v234 = vpack.c.b16 %v179, %v178
  %v235 = vpack.c.b16 %v181, %v180
  %v236 = vpack.c.b16 %v183, %v182
  %v237 = vpack.c.b16 %v185, %v184
  %v238 = vpack.c.b16 %v187, %v186
  %v239 = vpack.c.b16 %v189, %v188
  %v240 = vpack.c.b16 %v191, %v190
  %v241 = vpack.c.b16 %v193, %v192
  %v242 = vpack.c.b16 %v195, %v194
  %v243 = vpack.c.b16 %v197, %v196
  %v244 = vpack.c.b16 %v199, %v198
  %v245 = vpack.c.b16 %v201, %v200
  %v246 = vpack.c.b16 %v203, %v202
  %v247 = vpack.c.b16 %v205, %v204
  %v248 = vpack.c.b16 %v207, %v206
  %v249 = vpack.c.b16 %v209, %v208
  %v250 = vpack.c.b16 %v211, %v210
  %v251 = vpack.c.b16 %v213, %v212
  %v252 = vpack.c.b16 %v215, %v214
  %v253 = vpack.c.b16 %v217, %v216
  %v254 = vpack.c.b16 %v219, %v218
  %v255 = vpack.c.b16 %v221, %v220
  %v256 = vpack.c.b16 %v223, %v222
  %v257 = vpack.c.b16 %v225, %v224
  %290 = vmatpush.bf16.msra.mxu0 %v233
  %291 = vmatpush.bf16.msra.mxu0 %v232
  %292 = vmatpush.bf16.msra.mxu0 %v231
  %293 = vmatpush.bf16.msra.mxu0 %v230
  %294 = vmatpush.bf16.msra.mxu0 %v229
  %295 = vmatpush.bf16.msra.mxu0 %v228
  %296 = vmatpush.bf16.msra.mxu0 %v227
  %297 = vmatpush.bf16.msra.mxu0 %v226
  %298 = vmatmul.bf16.gmra.mxu0 %v90
  %v299 = vpop.f32.mrf.mxu0
  %v300 = vadd.f32 0.0, %v299
  %v301 = vpop.f32.mrf.mxu0
  %302 = vdwg.mxu0
  %303 = vmatpush.bf16.msra.mxu0 %v241
  %304 = vmatpush.bf16.msra.mxu0 %v240
  %305 = vmatpush.bf16.msra.mxu0 %v239
  %306 = vmatpush.bf16.msra.mxu0 %v238
  %307 = vmatpush.bf16.msra.mxu0 %v237
  %308 = vmatpush.bf16.msra.mxu0 %v236
  %309 = vmatpush.bf16.msra.mxu0 %v235
  %310 = vmatpush.bf16.msra.mxu0 %v234
  %311 = vmatmul.bf16.gmra.mxu0 %v91
  %v312 = vpop.f32.mrf.mxu0
  %v313 = vadd.f32 %v300, %v312
  %v314 = vpop.f32.mrf.mxu0
  %315 = vdwg.mxu0
  %316 = vmatpush.bf16.msra.mxu0 %v249
  %317 = vmatpush.bf16.msra.mxu0 %v248
  %318 = vmatpush.bf16.msra.mxu0 %v247
  %319 = vmatpush.bf16.msra.mxu0 %v246
  %320 = vmatpush.bf16.msra.mxu0 %v245
  %321 = vmatpush.bf16.msra.mxu0 %v244
  %322 = vmatpush.bf16.msra.mxu0 %v243
  %323 = vmatpush.bf16.msra.mxu0 %v242
  %324 = vmatmul.bf16.gmra.mxu0 %v92
  %v325 = vpop.f32.mrf.mxu0
  %v326 = vadd.f32 %v313, %v325
  %v327 = vpop.f32.mrf.mxu0
  %328 = vdwg.mxu0
  %329 = vmatpush.bf16.msra.mxu0 %v257
  %330 = vmatpush.bf16.msra.mxu0 %v256
  %331 = vmatpush.bf16.msra.mxu0 %v255
  %332 = vmatpush.bf16.msra.mxu0 %v254
  %333 = vmatpush.bf16.msra.mxu0 %v253
  %334 = vmatpush.bf16.msra.mxu0 %v252
  %335 = vmatpush.bf16.msra.mxu0 %v251
  %336 = vmatpush.bf16.msra.mxu0 %v250
  %337 = vmatmul.bf16.gmra.mxu0 %v93
  %v338 = vpop.f32.mrf.mxu0
  %v339 = vadd.f32 %v326, %v338
  %v340 = vpop.f32.mrf.mxu0
  %341 = vdwg.mxu0
  %v342 = vadd.f32 %v17, %v339
  %vm343 = vcmask 7168
  %344 = vst.msk [vmem:[#allocation2] sm:$0xff] %vm343, %v342
  // Predicated region
  $region14: #{_lambda_.5} parent=0 // pred_check
    %p345 = pneg %p11
  $region15: #{_lambda_.5} parent=0 // pred_check_branch
    %347 = sbr.rel (%p345) target = $region17
  $region16: #{_lambda_.5} parent=0 // pred_region
    %v348 = vld [vmem:[#allocation2] sm:$0xff]
    %349 = vst.msk [vmem:[%s2] sm:$0xff] %vm343, %v348
  $region17: #{_lambda_.5} parent=0 // pred_fallthru
    _
  // Predicated region
  $region18: #{_lambda_.5} parent=0 // pred_check
    _
  $region19: #{_lambda_.5} parent=0 // pred_check_branch
    %351 = sbr.rel (0) target = $region21
  $region20: #{_lambda_.5} parent=0 // pred_region
    _
  $region21: #{_lambda_.5} parent=0 // pred_fallthru
    _
  // Predicated region
  $region22: #{_lambda_.5} parent=0 // pred_check
    _
  $region23: #{_lambda_.5} parent=0 // pred_check_branch
    %353 = sbr.rel (0) target = $region25
  $region24: #{_lambda_.5} parent=0 // pred_region
    _
  $region25: #{_lambda_.5} parent=0 // pred_fallthru
    _

</llo_original>
